<compile_context>
chip_gen: v5e
topology: v5e:2x2
jax: 0.10.0
libtpu: 0.0.40
codegen_flags: <defaults>
</compile_context>

<pallas_src>
import jax
import jax.numpy as jnp
from jax.experimental import pallas as pl
from jax.experimental.pallas import tpu as pltpu

_LANES = 128
_TARGET_BLOCK_BYTES = 4 << 20  # 4 MiB per grid step, dtype-independent


def swish_kernel(x_ref, o_ref):
    xf = x_ref[...].astype(jnp.float32)
    # Numerically stable sigmoid routed through the EUP (tanh), VALU stays free.
    sig = 0.5 * (jnp.tanh(0.5 * xf) + 1.0)
    o_ref[...] = (xf * sig).astype(o_ref.dtype)


def _swish_jnp(x):
    xf = x.astype(jnp.float32)
    return (xf * jax.nn.sigmoid(xf)).astype(x.dtype)


def swish(x, *, target_block_bytes=_TARGET_BLOCK_BYTES, donate_input=False):
    """Elementwise Swish (x * sigmoid(x)).

    Accepts any shape; flattens to a lane-dense (rows, 128) slab for the
    aligned prefix and handles any sub-tile tail with plain jnp.

    donate_input=True aliases the input HBM buffer as the output
    (input_output_aliases) -- only safe if the caller never reads `x` again.
    """
    orig_shape = x.shape
    orig_dtype = x.dtype
    n = x.size

    itemsize = jnp.dtype(orig_dtype).itemsize
    sublane = max(8, 32 // itemsize)           # 8 (f32), 16 (bf16), 32 (int8/fp8)
    min_block = sublane * _LANES               # minimum (sublane,128) tile

    x_flat = jnp.ravel(x)                      # contiguous reshape: no HBM copy
    n_main = (n // min_block) * min_block      # aligned prefix handled by Pallas
    n_tail = n - n_main

    if n_main == 0:
        # Tiny tensor (< one (sublane,128) tile): not worth a kernel launch.
        return _swish_jnp(x_flat).reshape(orig_shape)

    rows = n_main // _LANES                    # multiple of `sublane`

    # Byte-constant block size so every dtype sees the same DMA size per step.
    target_rows = max(sublane, target_block_bytes // (_LANES * itemsize))
    target_rows = (target_rows // sublane) * sublane
    tile_rows = min(target_rows, rows)
    # Guarantee >=2 grid blocks (when possible) so v7x's 2nd TensorCore is used.
    if tile_rows == rows and rows >= 2 * sublane:
        tile_rows = ((rows // 2 + sublane - 1) // sublane) * sublane
    tile_rows = max(sublane, min(tile_rows, rows))
    grid = (pl.cdiv(rows, tile_rows),)

    x2d = x_flat[:n_main].reshape(rows, _LANES)

    extra_kwargs = {}
    if donate_input and n_tail == 0:
        # Reuse the input buffer for the output (caller must not reuse x).
        extra_kwargs["input_output_aliases"] = {0: 0}

    cost = pl.CostEstimate(
        flops=4 * n_main,                      # mul/add around the tanh
        transcendentals=n_main,                # one tanh per element
        bytes_accessed=2 * n_main * itemsize,  # one read + one write pass
    )

    out2d = pl.pallas_call(
        swish_kernel,
        out_shape=jax.ShapeDtypeStruct((rows, _LANES), orig_dtype),
        grid_spec=pltpu.PrefetchScalarGridSpec(
            num_scalar_prefetch=0,
            grid=grid,
            in_specs=[pl.BlockSpec((tile_rows, _LANES), lambda i: (i, 0))],
            out_specs=pl.BlockSpec((tile_rows, _LANES), lambda i: (i, 0)),
        ),
        compiler_params=pltpu.CompilerParams(
            dimension_semantics=("parallel",),   # shard blocks across TCs (v7x)
            vmem_limit_bytes=32 << 20,           # 16 MiB working set + headroom
        ),
        cost_estimate=cost,
        **extra_kwargs,
    )(x2d)

    if n_tail == 0:
        return out2d.reshape(orig_shape)

    # TODO(synk): fold the ragged tail into the kernel via a scalar-prefetched
    # element count + masked store to avoid this concat copy for odd sizes.
    tail_out = _swish_jnp(x_flat[n_main:])
    return jnp.concatenate([out2d.reshape(-1), tail_out]).reshape(orig_shape)


if __name__ == "__main__":
    key = jax.random.PRNGKey(0)
    x = jax.random.normal(key, (2, 4, 16, 16), dtype=jnp.float32)

    y = jax.block_until_ready(swish(x))

    # Reference check against plain JAX (exact sigmoid in-kernel -> tight tol).
    y_ref = x * jax.nn.sigmoid(x)
    assert y.shape == x.shape and y.dtype == x.dtype
    assert jnp.allclose(y, y_ref, atol=1e-5, rtol=1e-5), float(
        jnp.max(jnp.abs(y - y_ref))
    )

    print("KERNEL_OK")
</pallas_src>

<mosaic_0001>
module attributes {stable_mosaic.version = 11 : i64} {
  func.func @swish_kernel(%arg0: i32, %arg1: memref<8x128xf32, #tpu.memory_space<vmem>>, %arg2: memref<8x128xf32, #tpu.memory_space<vmem>>) attributes {dimension_semantics = [#tpu.dimension_semantics<parallel>], iteration_bounds = array<i64: 2>, scalar_prefetch = 0 : i64, scratch_operands = 0 : i64, tpu.core_type = #tpu.core_type<tc>, window_params = [{transform_indices = @transform_0, window_bounds = array<i64: 8, 128>}, {transform_indices = @transform_1, window_bounds = array<i64: 8, 128>}]} {
    %c0 = arith.constant 0 : index
    %c0_0 = arith.constant 0 : index
    %0 = vector.load %arg1[%c0, %c0_0] : memref<8x128xf32, #tpu.memory_space<vmem>>, vector<8x128xf32>
    %cst = arith.constant 5.000000e-01 : f32
    %1 = vector.broadcast %cst : f32 to vector<8x128xf32>
    %2 = arith.mulf %1, %0 : vector<8x128xf32>
    %3 = math.tanh %2 : vector<8x128xf32>
    %cst_1 = arith.constant 1.000000e+00 : f32
    %4 = vector.broadcast %cst_1 : f32 to vector<8x128xf32>
    %5 = arith.addf %3, %4 : vector<8x128xf32>
    %cst_2 = arith.constant 5.000000e-01 : f32
    %6 = vector.broadcast %cst_2 : f32 to vector<8x128xf32>
    %7 = arith.mulf %6, %5 : vector<8x128xf32>
    %8 = arith.mulf %0, %7 : vector<8x128xf32>
    %c0_3 = arith.constant 0 : index
    %c0_4 = arith.constant 0 : index
    %9 = vector.load %arg2[%c0_3, %c0_4] : memref<8x128xf32, #tpu.memory_space<vmem>>, vector<8x128xf32>
    tpu.vector_store %arg2[%c0_3, %c0_4], %8 {strides = array<i32>} : memref<8x128xf32, #tpu.memory_space<vmem>>, vector<8x128xf32>,
    return
  }
  func.func @transform_0(%arg0: i32) -> (i32, i32) {
    %c0_i32 = arith.constant 0 : i32
    %c0_i32_0 = arith.constant 0 : i32
    return %arg0, %c0_i32 : i32, i32
  }
  func.func @transform_1(%arg0: i32) -> (i32, i32) {
    %c0_i32 = arith.constant 0 : i32
    %c0_i32_0 = arith.constant 0 : i32
    return %arg0, %c0_i32 : i32, i32
  }
}

</mosaic_0001>

<llo_original>
// kernel: tpu_custom_call.1
$region0: #{tpu_custom_call.1}
  #allocation0 [shape = 'u32[]', space=smem, size = 0x4, offset = 0x4, fixed_abs, tag = 'smem constant byte address 0x4 - core index']
  #allocation1 [shape = 'u32[72,128]{1,0:T(1,128)}', space=vmem, size = 0x9000, scoped, tag = 'internal scratch']
  %s0 = inlined_call_operand.hbm [shape: f32[16,128], index: 0, kind: input, shape index: {}]
  %s1 = inlined_call_operand.hbm [shape: f32[16,128], index: 1, kind: output, shape index: {}]
  %s2 = sld [smem:[#allocation0]]
  $region41: #{tpu_custom_call.1} parent=0
    _
  %s4 = ssub.s32 1, %s2
  %s5 = scalar_select 0, %s4, %s2
  $region1: #{tpu_custom_call.1} parent=0
    #allocation2 [shape = 'u8[8192]{0}', space=vmem, size = 0x2000, scoped, tag = 'input window, operand 0']
    #allocation3 [shape = 's32[2]{0}', space=sflag, size = 0x8, scoped, tag = 'scoped memory for tpu_custom_call.1']
    #allocation4 [shape = 's32[2]{0}', space=sflag, size = 0x8, scoped, tag = 'scoped memory for tpu_custom_call.1']
    #allocation5 [shape = 'u8[8192]{0}', space=vmem, size = 0x2000, scoped, tag = 'output window, operand 0']
    %6 = vsyncpa [#allocation3], 0
    %s7 = scalar_lea.sflag [#allocation3], 1
    %8 = vsyncpa %s7, 0
    %9 = vsyncpa [#allocation4], 0
    %s10 = scalar_lea.sflag [#allocation4], 1
    %11 = vsyncpa %s10, 0
    loop: start=0, step=1, limit=4
    $region2: #{tpu_custom_call.1} parent=1 // loop_pre_header
      _
    $region3: #{tpu_custom_call.1} parent=1 // loop_header
      %s13 = sphi 0, %s17
      %p14 = scmp.ge.s32.totalorder %s13, 4
      %s23 = sphi 0, %s25
      %s26 = sphi 0, %s23
      %s27 = sphi 0, %s26
      %s43 = sphi 0, %s27
      %s49 = sphi 0, %s51
      %s52 = sphi 0, %s49
      %s53 = sphi 0, %s52
      %s69 = sphi 0, %s53
    $region4: #{tpu_custom_call.1} parent=1 // loop_header_branch
      %16 = sbr.rel (%p14) target = $region8
    $region5: #{tpu_custom_call.1} parent=1 // loop_body
      %s18 = ssub.s32 %s13, 1
      %s19 = ssub.s32 %s13, 2
      %s20 = sadd.s32 %s13, 1
      %s21 = ssub.s32 %s13, %s20
      %p22 = scmp.eq.s32.totalorder %s21, 0
      %s24 = sadd.s32 %s23, 1
      %s25 = scalar_select %p22, %s23, %s24
      %p28 = pneg %p22
      %p29 = scmp.eq.s32.totalorder %s13, 1
      %p30 = por %p28, %p29
      %p31 = scmp.ne.s32.totalorder %s23, %s26
      %p32 = scmp.eq.s32.totalorder %s13, 0
      %p33 = por %p31, %p32
      %p34 = scmp.ne.s32.totalorder %s23, %s26
      %p35 = scmp.eq.s32.totalorder %s18, 1
      %p36 = por %p34, %p35
      %p37 = scmp.ne.s32.totalorder %s26, %s27
      %p38 = scmp.eq.s32.totalorder %s18, 0
      %p39 = por %p37, %p38
      %p40 = scmp.ne.s32.totalorder %s26, %s27
      %p41 = scmp.eq.s32.totalorder %s19, 1
      %p42 = por %p40, %p41
      %p44 = scmp.ne.s32.totalorder %s27, %s43
      %p45 = scmp.eq.s32.totalorder %s19, 0
      %p46 = por %p44, %p45
      %s47 = ssub.s32 %s13, %s20
      %p48 = scmp.eq.s32.totalorder %s47, 0
      %s50 = sadd.s32 %s49, 1
      %s51 = scalar_select %p48, %s49, %s50
      %p54 = pneg %p48
      %p55 = scmp.eq.s32.totalorder %s13, 1
      %p56 = por %p54, %p55
      %p57 = scmp.ne.s32.totalorder %s49, %s52
      %p58 = scmp.eq.s32.totalorder %s13, 0
      %p59 = por %p57, %p58
      %p60 = scmp.ne.s32.totalorder %s49, %s52
      %p61 = scmp.eq.s32.totalorder %s18, 1
      %p62 = por %p60, %p61
      %p63 = scmp.ne.s32.totalorder %s52, %s53
      %p64 = scmp.eq.s32.totalorder %s18, 0
      %p65 = por %p63, %p64
      %p66 = scmp.ne.s32.totalorder %s52, %s53
      %p67 = scmp.eq.s32.totalorder %s19, 1
      %p68 = por %p66, %p67
      %p70 = scmp.ne.s32.totalorder %s53, %s69
      %p71 = scmp.eq.s32.totalorder %s19, 0
      %p72 = por %p70, %p71
      %p73 = scmp.le.s32.totalorder 1, %s13
      %p74 = scmp.lt.s32.totalorder %s13, 3
      %p75 = pnand %p73, %p74
      %p76 = pneg %p75
      // Predicated region
      $region9: #{tpu_custom_call.1} parent=5 // pred_check
        _
      $region10: #{tpu_custom_call.1} parent=5 // pred_check_branch
        %78 = sbr.rel (%p75) target = $region12
      $region11: #{tpu_custom_call.1} parent=5 // pred_region
        %s79 = ssub.s32 %s13, 1
      $region12: #{tpu_custom_call.1} parent=5 // pred_fallthru
        _
      %p80 = scmp.lt.s32.totalorder %s13, 2
      // Predicated region
      $region13: #{tpu_custom_call.1} parent=5 // pred_check
        %p81 = pneg %p80
      $region14: #{tpu_custom_call.1} parent=5 // pred_check_branch
        %83 = sbr.rel (%p81) target = $region16
      $region15: #{tpu_custom_call.1} parent=5 // pred_region
        // Predicated region
        $region17: #{tpu_custom_call.1} parent=15 // pred_check
          %p84 = pneg %p33
        $region18: #{tpu_custom_call.1} parent=15 // pred_check_branch
          %86 = sbr.rel (%p84) target = $region20
        $region19: #{tpu_custom_call.1} parent=15 // pred_region
          %s87 = sand.u32 %s23, 1
          %s88 = scalar_lea.sflag [#allocation3], %s87
          %s89 = sand.u32 %s23, 1
          %s90 = smul.addr %s89, 8
          %s91 = scalar_lea.vmem [#allocation2], %s90
          %93 = vsyncadd %s88, 0
          %s94 = smul.addr %s13, 8
          %s95 = scalar_lea.hbm %s0, %s94
          %s97 = sshll.u32 %s95, 4
          %s98 = int_to_ptr.hbm [resolvable:$true] %s97
          %s99 = sshll.u32 %s91, 4
          %s100 = int_to_ptr.vmem [resolvable:$true] %s99
          %102 = dma.hbm_to_vmem [thread:$0]  %s98, 128, %s100, %s88
        $region20: #{tpu_custom_call.1} parent=15 // pred_fallthru
          _
      $region16: #{tpu_custom_call.1} parent=5 // pred_fallthru
        _
      %p103 = scmp.le.s32.totalorder 1, %s13
      %p104 = scmp.lt.s32.totalorder %s13, 3
      %p105 = pnand %p103, %p104
      %p106 = pneg %p105
      // Predicated region
      $region21: #{tpu_custom_call.1} parent=5 // pred_check
        _
      $region22: #{tpu_custom_call.1} parent=5 // pred_check_branch
        %108 = sbr.rel (%p105) target = $region24
      $region23: #{tpu_custom_call.1} parent=5 // pred_region
        %s109 = ssub.s32 %s13, 1
        %s110 = sand.u32 %s26, 1
        %s111 = scalar_lea.sflag [#allocation3], %s110
        %s112 = sand.u32 %s26, 1
        %s113 = smul.addr %s112, 8
        %s114 = scalar_lea.vmem [#allocation2], %s113
        // Predicated region
        $region25: #{tpu_custom_call.1} parent=23 // pred_check
          %p115 = pneg %p39
        $region26: #{tpu_custom_call.1} parent=23 // pred_check_branch
          %117 = sbr.rel (%p115) target = $region28
        $region27: #{tpu_custom_call.1} parent=23 // pred_region
          %119 = dma.done %s111, 128
        $region28: #{tpu_custom_call.1} parent=23 // pred_fallthru
          _
        %s120 = sand.u32 %s26, 1
        %s121 = scalar_lea.sflag [#allocation3], %s120
        %s122 = sand.u32 %s26, 1
        %s123 = smul.addr %s122, 8
        %s124 = scalar_lea.vmem [#allocation2], %s123
        %p125 = pneg %p39
        %p126 = pneg %p36
        %p127 = pneg %p65
        %p128 = pneg %p62
        %s129 = sand.u32 %s52, 1
        %s130 = scalar_lea.sflag [#allocation4], %s129
        %s131 = sand.u32 %s52, 1
        %s132 = smul.addr %s131, 8
        %s133 = scalar_lea.vmem [#allocation5], %s132
        %v134 = vld [vmem:[%s114] sm:$0xff]
        %v135 = vmul.f32 %v134, 0.5
        %v136 = vtanh.pop %v135
        %v137 = vadd.f32 %v136, 1.0
        %v138 = vmul.f32 %v137, 0.5
        %v139 = vmul.f32 %v134, %v138
        %140 = vst [vmem:[%s133] sm:$0xff] %v139
        %s141 = sand.u32 %s52, 1
        %s142 = scalar_lea.sflag [#allocation4], %s141
        %s143 = sand.u32 %s52, 1
        %s144 = smul.addr %s143, 8
        %s145 = scalar_lea.vmem [#allocation5], %s144
        // Predicated region
        $region29: #{tpu_custom_call.1} parent=23 // pred_check
          %p146 = pneg %p62
        $region30: #{tpu_custom_call.1} parent=23 // pred_check_branch
          %148 = sbr.rel (%p146) target = $region32
        $region31: #{tpu_custom_call.1} parent=23 // pred_region
          %150 = vsyncadd %s142, 0
          %s151 = smul.addr %s18, 8
          %s152 = scalar_lea.hbm %s1, %s151
          %s154 = sshll.u32 %s145, 4
          %s155 = int_to_ptr.vmem [resolvable:$true] %s154
          %s156 = sshll.u32 %s152, 4
          %s157 = int_to_ptr.hbm [resolvable:$true] %s156
          %159 = dma.vmem_to_hbm [thread:$0]  %s155, 128, %s157, %s142
        $region32: #{tpu_custom_call.1} parent=23 // pred_fallthru
          _
      $region24: #{tpu_custom_call.1} parent=5 // pred_fallthru
        _
      %p160 = scmp.le.s32.totalorder 2, %s13
      // Predicated region
      $region33: #{tpu_custom_call.1} parent=5 // pred_check
        %p161 = pneg %p160
      $region34: #{tpu_custom_call.1} parent=5 // pred_check_branch
        %163 = sbr.rel (%p161) target = $region36
      $region35: #{tpu_custom_call.1} parent=5 // pred_region
        %s164 = ssub.s32 %s13, 2
        // Predicated region
        $region37: #{tpu_custom_call.1} parent=35 // pred_check
          %p165 = pneg %p68
        $region38: #{tpu_custom_call.1} parent=35 // pred_check_branch
          %167 = sbr.rel (%p165) target = $region40
        $region39: #{tpu_custom_call.1} parent=35 // pred_region
          %s168 = sand.u32 %s53, 1
          %s169 = scalar_lea.sflag [#allocation4], %s168
          %s170 = sand.u32 %s53, 1
          %s171 = smul.addr %s170, 8
          %s172 = scalar_lea.vmem [#allocation5], %s171
          %174 = dma.done %s169, 128
        $region40: #{tpu_custom_call.1} parent=35 // pred_fallthru
          _
      $region36: #{tpu_custom_call.1} parent=5 // pred_fallthru
        _
    $region6: #{tpu_custom_call.1} parent=1 // loop_footer
      %s17 = sadd.s32 1, %s13
    $region7: #{tpu_custom_call.1} parent=1 // loop_footer_branch
      %12 = sbr.rel target = $region3
    $region8: #{tpu_custom_call.1} parent=1 // loop_exit
      _
    %175 = vsyncpa [#allocation3], 1
    %s176 = scalar_lea.sflag [#allocation3], 1
    %177 = vsyncpa %s176, 1
    %178 = vsyncpa [#allocation4], 1
    %s179 = scalar_lea.sflag [#allocation4], 1
    %180 = vsyncpa %s179, 1

</llo_original>
